<compile_context>
chip_gen: v7x
topology: tpu7x:2x2x1
jax: 0.10.0
libtpu: 0.0.40
codegen_flags: <defaults>
</compile_context>

<pallas_src>
import jax
import jax.numpy as jnp
from jax.experimental import pallas as pl
from jax.experimental.pallas import tpu as pltpu


def _round_up(v, m):
    return -(-v // m) * m


def _vmem_limit_bytes():
    """~75% of this chip's physical VMEM (96 MiB v5e/v6e, 48 MiB v7x); safe fallback."""
    try:
        phys = int(pltpu.get_tpu_info().vmem_capacity_bytes)
    except Exception:
        phys = 0
    if phys <= 0:
        phys = 64 << 20          # conservative (v7x-sized) assumption
    return (phys * 3) // 4


# ---------------------------------------------------------------------------
# Fused path: one kernel, (Bb, C, HW) block resident in VMEM (2 HBM passes).
# ---------------------------------------------------------------------------
def _eca_fused_kernel(x_ref, w1t_ref, b1_ref, w2t_ref, b2_ref, o_ref):
    x = x_ref[...]                                            # (Bb, C, HW) input dtype
    inv_hw = 1.0 / x.shape[-1]
    # f32-accumulating pooled means (no long-lived f32 copy of the slab).
    y = jnp.sum(x, axis=-1, dtype=jnp.float32) * inv_hw       # (Bb, C)
    gc = jnp.sum(y * y, axis=-1, keepdims=True)               # (Bb, 1) per-batch y.y^T
    h = jnp.maximum(
        jnp.dot(y, w1t_ref[...], preferred_element_type=jnp.float32)
        + b1_ref[...] + gc, 0.0)                              # (Bb, Cr)
    s = jax.nn.sigmoid(
        jnp.dot(h, w2t_ref[...], preferred_element_type=jnp.float32)
        + b2_ref[...])                                        # (Bb, C)
    # Channel-wise rescale in the input dtype; (Bb, C, 1) broadcasts over HW lanes.
    o_ref[...] = x * s.astype(x.dtype)[:, :, None]


def _eca_fused(x, w1, b1, w2, b2, bb, vmem_limit):
    B, C, HW = x.shape
    Cr = w1.shape[0]
    w1t = w1.astype(jnp.float32).T                 # (C, Cr)
    w2t = w2.astype(jnp.float32).T                 # (Cr, C)
    b1r = b1.astype(jnp.float32).reshape(1, Cr)
    b2r = b2.astype(jnp.float32).reshape(1, C)
    n_b = pl.cdiv(B, bb)
    return pl.pallas_call(
        _eca_fused_kernel,
        out_shape=jax.ShapeDtypeStruct((B, C, HW), x.dtype),
        grid=(n_b,),
        in_specs=[
            pl.BlockSpec((bb, C, HW), lambda i: (i, 0, 0)),    # Bb-batch slab
            pl.BlockSpec((C, Cr), lambda i: (0, 0)),           # resident weights
            pl.BlockSpec((1, Cr), lambda i: (0, 0)),
            pl.BlockSpec((Cr, C), lambda i: (0, 0)),
            pl.BlockSpec((1, C), lambda i: (0, 0)),
        ],
        out_specs=pl.BlockSpec((bb, C, HW), lambda i: (i, 0, 0)),
        compiler_params=pltpu.CompilerParams(
            dimension_semantics=("parallel",),
            vmem_limit_bytes=int(vmem_limit)),
    )(x, w1t, b1r, w2t, b2r)


# ---------------------------------------------------------------------------
# Split path: streaming pool kernel + rescale kernel (SE gate recomputed in-kernel).
# ---------------------------------------------------------------------------
def _make_pool_kernel(hw, hw_tile, tiles_per_group, need_mask):
    def kernel(x_ref, ysum_ref):
        t = pl.program_id(2)

        @pl.when(t == 0)
        def _():
            ysum_ref[...] = jnp.zeros_like(ysum_ref)

        x = x_ref[...]                                        # (C, hw_tile)
        if need_mask:
            start = (pl.program_id(1) * tiles_per_group + t) * hw_tile
            col = jax.lax.broadcasted_iota(jnp.int32, x.shape, 1)
            x = jnp.where(col < (hw - start), x, 0)
        ysum_ref[...] += jnp.sum(x, axis=-1, keepdims=True, dtype=jnp.float32)

    return kernel


def _make_rescale_kernel(hw):
    inv_hw = 1.0 / hw

    def kernel(ysum_ref, w1_ref, b1_ref, w2_ref, b2_ref, x_ref, o_ref):
        # Recompute the tiny SE gate per tile (O(C*Cr) MACs) so both grid axes stay
        # 'parallel' and no separate XLA phase / kernel round trip is needed.
        y = jnp.sum(ysum_ref[...], axis=0) * inv_hw           # (C, 1) channel means
        gc = jnp.sum(y * y)                                   # scalar y.y^T
        h = jnp.maximum(
            jnp.dot(w1_ref[...], y, preferred_element_type=jnp.float32)
            + b1_ref[...] + gc, 0.0)                          # (Cr, 1)
        s = jax.nn.sigmoid(
            jnp.dot(w2_ref[...], h, preferred_element_type=jnp.float32)
            + b2_ref[...])                                    # (C, 1)
        x = x_ref[...]                                        # (C, hw_tile)
        o_ref[...] = x * s.astype(x.dtype)                    # lane broadcast

    return kernel


def _eca_split(x, w1, b1, w2, b2, hw_tile, vmem_limit):
    B, C, HW = x.shape
    Cr = w1.shape[0]
    n_t = pl.cdiv(HW, hw_tile)
    n_par = 2 if (B == 1 and n_t >= 2) else 1      # keep 2nd TC busy at B=1 (v7x)
    tpg = pl.cdiv(n_t, n_par)
    need_mask = (n_t * hw_tile != HW) or (n_par * tpg != n_t)

    # Phase 1: streaming global-average-pool -> partial channel sums (B, n_par, C, 1).
    ysum = pl.pallas_call(
        _make_pool_kernel(HW, hw_tile, tpg, need_mask),
        out_shape=jax.ShapeDtypeStruct((B, n_par, C, 1), jnp.float32),
        grid=(B, n_par, tpg),
        in_specs=[pl.BlockSpec((None, C, hw_tile),
                               lambda b, p, t: (b, 0, p * tpg + t))],
        out_specs=pl.BlockSpec((None, None, C, 1), lambda b, p, t: (b, p, 0, 0)),
        compiler_params=pltpu.CompilerParams(
            dimension_semantics=("parallel", "parallel", "arbitrary"),
            vmem_limit_bytes=int(vmem_limit)),
    )(x)

    # Phase 2: elementwise rescale, fully parallel (B, HW_tiles) grid.
    w1f = w1.astype(jnp.float32)
    w2f = w2.astype(jnp.float32)
    b1c = b1.astype(jnp.float32).reshape(Cr, 1)
    b2c = b2.astype(jnp.float32).reshape(C, 1)
    # NOTE: if xprof shows exposed DMA here, pipeline_mode=pl.Buffered(3) on the x
    # in_spec is a cheap follow-up; not enabled by default.
    out = pl.pallas_call(
        _make_rescale_kernel(HW),
        out_shape=jax.ShapeDtypeStruct((B, C, HW), x.dtype),
        grid=(B, n_t),
        in_specs=[
            pl.BlockSpec((None, n_par, C, 1), lambda b, t: (b, 0, 0, 0)),
            pl.BlockSpec((Cr, C), lambda b, t: (0, 0)),
            pl.BlockSpec((Cr, 1), lambda b, t: (0, 0)),
            pl.BlockSpec((C, Cr), lambda b, t: (0, 0)),
            pl.BlockSpec((C, 1), lambda b, t: (0, 0)),
            pl.BlockSpec((None, C, hw_tile), lambda b, t: (b, 0, t)),
        ],
        out_specs=pl.BlockSpec((None, C, hw_tile), lambda b, t: (b, 0, t)),
        compiler_params=pltpu.CompilerParams(
            dimension_semantics=("parallel", "parallel"),
            vmem_limit_bytes=int(vmem_limit)),
    )(ysum, w1f, b1c, w2f, b2c, x)
    return out


# ---------------------------------------------------------------------------
# Wrapper: NCHW in/out with only free reshapes; VMEM-aware dispatch.
# ---------------------------------------------------------------------------
def eca_layer(x_nchw, w1, b1, w2, b2, *,
              force_path=None,                  # None | "fused" | "split"
              batch_block=None,                 # fused path: batches per grid step
              hw_tile_bytes=None,               # split path: target x-tile bytes
              fused_block_target_bytes=4 << 20):
    """x_nchw: (B, C, H, W); w1: (Cr, C); b1: (Cr,); w2: (C, Cr); b2: (C,)."""
    B, C, H, W = x_nchw.shape
    Cr = w1.shape[0]
    HW = H * W

    # Free reshape (merges contiguous trailing dims): HW lands on the lane axis.
    x = x_nchw.reshape(B, C, HW)
    itemsize = jnp.dtype(x.dtype).itemsize
    sub = (8 * 4) // itemsize                   # sublane packing: 8 (f32) / 16 (bf16)
    c_pad = _round_up(C, sub)
    hw_pad = _round_up(HW, 128)
    slab_pad = c_pad * hw_pad * itemsize        # padded per-batch (C, HW) bytes

    vmem_limit = _vmem_limit_bytes()
    fused_budget = vmem_limit - (2 << 20)       # headroom under the explicit limit
    weight_bytes = 4 * (_round_up(C, 8) * _round_up(Cr, 128)
                        + _round_up(Cr, 8) * _round_up(C, 128)
                        + _round_up(Cr, 8) * 128 + _round_up(C, 8) * 128)

    def fused_vmem_est(bb):
        blk = bb * slab_pad                                 # one (Bb, C, HW) block
        f32_tmp = bb * c_pad * hw_pad * 4 if itemsize < 4 else 0   # bf16 reduce upcast
        return 4 * blk + f32_tmp + 2 * weight_bytes + (1 << 20)    # dbl-buf in+out

    use_fused = fused_vmem_est(1) <= fused_budget
    if force_path == "fused":
        use_fused = True
    elif force_path == "split":
        use_fused = False

    if use_fused:
        if batch_block is None:
            per_blk = 4 * slab_pad + (c_pad * hw_pad * 4 if itemsize < 4 else 0)
            bb_cap = max(1, (fused_budget - 2 * weight_bytes - (1 << 20)) // per_blk)
            bb = max(1, min(B, fused_block_target_bytes // max(slab_pad, 1), bb_cap))
        else:
            bb = max(1, min(B, batch_block))
        out = _eca_fused(x, w1, b1, w2, b2, int(bb), vmem_limit)
    else:
        target = hw_tile_bytes if hw_tile_bytes is not None else min(
            4 << 20, max(512 << 10, vmem_limit // 10))
        hw_tile = max(128, (target // max(c_pad * itemsize, 1)) // 128 * 128)
        if hw_tile >= HW:
            hw_tile = HW          # full-extent lane block is always legal
        out = _eca_split(x, w1, b1, w2, b2, int(hw_tile), vmem_limit)

    return out.reshape(B, C, H, W)


if __name__ == "__main__":
    B, C, H, W = 2, 4, 16, 16
    reduction = 1
    Cr = C // reduction

    key = jax.random.PRNGKey(0)
    k1, k2, k3, k4, k5, k6 = jax.random.split(key, 6)
    x = jax.random.normal(k1, (B, C, H, W), dtype=jnp.float32)
    # Deterministic synthetic parameters (Conv2d 1x1 weights squeezed to 2-D).
    w1 = 0.1 * jax.random.normal(k2, (Cr, C), dtype=jnp.float32)
    b1 = 0.1 * jax.random.normal(k3, (Cr,), dtype=jnp.float32)
    w2 = 0.1 * jax.random.normal(k4, (C, Cr), dtype=jnp.float32)
    b2 = 0.1 * jax.random.normal(k5, (C,), dtype=jnp.float32)

    def reference(xf):
        y = jnp.mean(xf, axis=(2, 3))                            # (B, C)
        gc = jnp.sum(y * y, axis=1, keepdims=True)               # (B, 1)
        h = jnp.maximum(y @ w1.T + b1[None, :] + gc, 0.0)        # (B, Cr)
        s = jax.nn.sigmoid(h @ w2.T + b2[None, :])               # (B, C)
        return xf * s[:, :, None, None]

    ref = reference(x)

    # 1) Default dispatch -> fused path, multiple batches per grid step.
    out_fused = jax.block_until_ready(eca_layer(x, w1, b1, w2, b2))
    assert out_fused.shape == x.shape and out_fused.dtype == x.dtype
    assert jnp.allclose(out_fused, ref, atol=1e-5, rtol=1e-5), "fused path mismatch"

    # 2) Fused path with a ragged batch block (B=3, Bb=2 -> cdiv grid, OOB rows dropped).
    x3 = jax.random.normal(k6, (3, C, H, W), dtype=jnp.float32)
    ref3 = reference(x3)
    out3 = jax.block_until_ready(
        eca_layer(x3, w1, b1, w2, b2, force_path="fused", batch_block=2))
    assert jnp.allclose(out3, ref3, atol=1e-5, rtol=1e-5), "ragged-batch fused mismatch"

    # 3) Forced split path with 128-wide tiles (HW=256 -> 2 tiles per batch).
    out_split = jax.block_until_ready(
        eca_layer(x, w1, b1, w2, b2, force_path="split", hw_tile_bytes=4096))
    assert jnp.allclose(out_split, ref, atol=1e-5, rtol=1e-5), "split path mismatch"

    # 4) Split path with ragged HW (H=W=20 -> HW=400, 128-wide tiles, masked last tile)
    #    at B=1, exercising the parallel partial-sum split (n_par=2).
    x_r = jax.random.normal(k1, (1, C, 20, 20), dtype=jnp.float32)
    ref_r = reference(x_r)
    out_r = jax.block_until_ready(
        eca_layer(x_r, w1, b1, w2, b2, force_path="split", hw_tile_bytes=4096))
    assert jnp.allclose(out_r, ref_r, atol=1e-5, rtol=1e-5), "ragged-HW split mismatch"

    # 5) bf16 streaming input/output; accumulation and SE math stay f32.
    x16 = x.astype(jnp.bfloat16)
    out16 = jax.block_until_ready(eca_layer(x16, w1, b1, w2, b2))
    assert out16.dtype == jnp.bfloat16
    ref16 = reference(x16.astype(jnp.float32))
    assert jnp.allclose(out16.astype(jnp.float32), ref16, atol=3e-2, rtol=3e-2), \
        "bf16 path mismatch"

    print("KERNEL_OK")
</pallas_src>

<mosaic_0001>
module attributes {stable_mosaic.version = 11 : i64} {
  func.func @_eca_fused_kernel(%arg0: i32, %arg1: memref<2x4x256xf32, #tpu.memory_space<vmem>>, %arg2: memref<4x4xf32, #tpu.memory_space<vmem>>, %arg3: memref<1x4xf32, #tpu.memory_space<vmem>>, %arg4: memref<4x4xf32, #tpu.memory_space<vmem>>, %arg5: memref<1x4xf32, #tpu.memory_space<vmem>>, %arg6: memref<2x4x256xf32, #tpu.memory_space<vmem>>) attributes {dimension_semantics = [#tpu.dimension_semantics<parallel>], iteration_bounds = array<i64: 1>, scalar_prefetch = 0 : i64, scratch_operands = 0 : i64, tpu.core_type = #tpu.core_type<tc>, window_params = [{transform_indices = @transform_0, window_bounds = array<i64: 2, 4, 256>}, {pipeline_mode = #tpu.pipeline_mode<synchronous>, transform_indices = @transform_1, window_bounds = array<i64: 4, 4>}, {pipeline_mode = #tpu.pipeline_mode<synchronous>, transform_indices = @transform_2, window_bounds = array<i64: 1, 4>}, {pipeline_mode = #tpu.pipeline_mode<synchronous>, transform_indices = @transform_3, window_bounds = array<i64: 4, 4>}, {pipeline_mode = #tpu.pipeline_mode<synchronous>, transform_indices = @transform_4, window_bounds = array<i64: 1, 4>}, {transform_indices = @transform_5, window_bounds = array<i64: 2, 4, 256>}]} {
    %c0 = arith.constant 0 : index
    %c0_0 = arith.constant 0 : index
    %c0_1 = arith.constant 0 : index
    %0 = vector.load %arg1[%c0, %c0_0, %c0_1] : memref<2x4x256xf32, #tpu.memory_space<vmem>>, vector<2x4x256xf32>
    %cst = arith.constant dense<0.000000e+00> : vector<2x4xf32>
    %1 = vector.multi_reduction <add>, %0, %cst [2] : vector<2x4x256xf32> to vector<2x4xf32>
    %cst_2 = arith.constant 3.906250e-03 : f32
    %2 = vector.broadcast %cst_2 : f32 to vector<2x4xf32>
    %3 = arith.mulf %1, %2 : vector<2x4xf32>
    %4 = arith.mulf %3, %3 : vector<2x4xf32>
    %cst_3 = arith.constant dense<0.000000e+00> : vector<2xf32>
    %5 = vector.multi_reduction <add>, %4, %cst_3 [1] : vector<2x4xf32> to vector<2xf32>
    %6 = vector.shape_cast %5 : vector<2xf32> to vector<2x1xf32>
    %c0_4 = arith.constant 0 : index
    %c0_5 = arith.constant 0 : index
    %7 = vector.load %arg2[%c0_4, %c0_5] : memref<4x4xf32, #tpu.memory_space<vmem>>, vector<4x4xf32>
    %cst_6 = arith.constant dense<0.000000e+00> : vector<2x4xf32>
    %8 = tpu.matmul %3, %7, %cst_6 {dimension_numbers = #tpu.dot_dimension_numbers<[1], [0], [0], [1], [0, 0, 1, 1], [], []>} : vector<2x4xf32>, vector<4x4xf32>, vector<2x4xf32> -> vector<2x4xf32>
    %c0_7 = arith.constant 0 : index
    %c0_8 = arith.constant 0 : index
    %9 = vector.load %arg3[%c0_7, %c0_8] : memref<1x4xf32, #tpu.memory_space<vmem>>, vector<1x4xf32>
    %10 = vector.broadcast %9 : vector<1x4xf32> to vector<2x4xf32>
    %11 = arith.addf %8, %10 : vector<2x4xf32>
    %12 = vector.broadcast %6 : vector<2x1xf32> to vector<2x4xf32>
    %13 = arith.addf %11, %12 : vector<2x4xf32>
    %cst_9 = arith.constant 0.000000e+00 : f32
    %14 = vector.broadcast %cst_9 : f32 to vector<2x4xf32>
    %15 = arith.maximumf %13, %14 : vector<2x4xf32>
    %c0_10 = arith.constant 0 : index
    %c0_11 = arith.constant 0 : index
    %16 = vector.load %arg4[%c0_10, %c0_11] : memref<4x4xf32, #tpu.memory_space<vmem>>, vector<4x4xf32>
    %cst_12 = arith.constant dense<0.000000e+00> : vector<2x4xf32>
    %17 = tpu.matmul %15, %16, %cst_12 {dimension_numbers = #tpu.dot_dimension_numbers<[1], [0], [0], [1], [0, 0, 1, 1], [], []>} : vector<2x4xf32>, vector<4x4xf32>, vector<2x4xf32> -> vector<2x4xf32>
    %c0_13 = arith.constant 0 : index
    %c0_14 = arith.constant 0 : index
    %18 = vector.load %arg5[%c0_13, %c0_14] : memref<1x4xf32, #tpu.memory_space<vmem>>, vector<1x4xf32>
    %19 = vector.broadcast %18 : vector<1x4xf32> to vector<2x4xf32>
    %20 = arith.addf %17, %19 : vector<2x4xf32>
    %21 = arith.negf %20 : vector<2x4xf32>
    %22 = math.exp %21 : vector<2x4xf32>
    %cst_15 = arith.constant 1.000000e+00 : f32
    %23 = vector.broadcast %cst_15 : f32 to vector<2x4xf32>
    %24 = arith.addf %23, %22 : vector<2x4xf32>
    %25 = arith.divf %23, %24 : vector<2x4xf32>
    %26 = vector.shape_cast %25 : vector<2x4xf32> to vector<2x4x1xf32>
    %27 = vector.broadcast %26 : vector<2x4x1xf32> to vector<2x4x256xf32>
    %28 = arith.mulf %0, %27 : vector<2x4x256xf32>
    %c0_16 = arith.constant 0 : index
    %c0_17 = arith.constant 0 : index
    %c0_18 = arith.constant 0 : index
    %29 = vector.load %arg6[%c0_16, %c0_17, %c0_18] : memref<2x4x256xf32, #tpu.memory_space<vmem>>, vector<2x4x256xf32>
    tpu.vector_store %arg6[%c0_16, %c0_17, %c0_18], %28 {strides = array<i32>} : memref<2x4x256xf32, #tpu.memory_space<vmem>>, vector<2x4x256xf32>,
    return
  }
  func.func @transform_0(%arg0: i32) -> (i32, i32, i32) {
    %c0_i32 = arith.constant 0 : i32
    %c0_i32_0 = arith.constant 0 : i32
    %c0_i32_1 = arith.constant 0 : i32
    return %arg0, %c0_i32, %c0_i32_0 : i32, i32, i32
  }
  func.func @transform_1(%arg0: i32) -> (i32, i32) {
    %c0_i32 = arith.constant 0 : i32
    %c0_i32_0 = arith.constant 0 : i32
    %c0_i32_1 = arith.constant 0 : i32
    return %c0_i32, %c0_i32_0 : i32, i32
  }
  func.func @transform_2(%arg0: i32) -> (i32, i32) {
    %c0_i32 = arith.constant 0 : i32
    %c0_i32_0 = arith.constant 0 : i32
    %c0_i32_1 = arith.constant 0 : i32
    return %c0_i32, %c0_i32_0 : i32, i32
  }
  func.func @transform_3(%arg0: i32) -> (i32, i32) {
    %c0_i32 = arith.constant 0 : i32
    %c0_i32_0 = arith.constant 0 : i32
    %c0_i32_1 = arith.constant 0 : i32
    return %c0_i32, %c0_i32_0 : i32, i32
  }
  func.func @transform_4(%arg0: i32) -> (i32, i32) {
    %c0_i32 = arith.constant 0 : i32
    %c0_i32_0 = arith.constant 0 : i32
    %c0_i32_1 = arith.constant 0 : i32
    return %c0_i32, %c0_i32_0 : i32, i32
  }
  func.func @transform_5(%arg0: i32) -> (i32, i32, i32) {
    %c0_i32 = arith.constant 0 : i32
    %c0_i32_0 = arith.constant 0 : i32
    %c0_i32_1 = arith.constant 0 : i32
    return %arg0, %c0_i32, %c0_i32_0 : i32, i32, i32
  }
}

</mosaic_0001>

<llo_original>
// kernel: tpu_custom_call.1
$region0: #{tpu_custom_call.1}
  #allocation0 [shape = 'u32[]', space=smem, size = 0x4, offset = 0x4, fixed_abs, tag = 'smem constant byte address 0x4 - core index']
  #allocation1 [shape = 'u32[144,128]{1,0:T(1,128)}', space=vmem, size = 0x12000, scoped, tag = 'internal scratch']
  %s0 = inlined_call_operand.hbm [shape: f32[2,4,256], index: 0, kind: input, shape index: {}]
  %s1 = inlined_call_operand.hbm [shape: f32[4,4], index: 1, kind: input, shape index: {}]
  %s2 = inlined_call_operand.vmem [shape: f32[1,4], index: 2, kind: input, shape index: {}]
  %s3 = inlined_call_operand.vmem [shape: f32[4,4], index: 3, kind: input, shape index: {}]
  %s4 = inlined_call_operand.vmem [shape: f32[1,4], index: 4, kind: input, shape index: {}]
  %s5 = inlined_call_operand.hbm [shape: f32[2,4,256], index: 5, kind: output, shape index: {}]
  %s6 = sld [smem:[#allocation0]]
  $region38: #{tpu_custom_call.1} parent=0
    _
  %s8 = ssub.s32 1, %s6
  %s9 = scalar_select 0, %s8, %s6
  $region1: #{tpu_custom_call.1} parent=0
    #allocation2 [shape = 'u8[8192]{0}', space=vmem, size = 0x2000, scoped, tag = 'input window, operand 0, single buffered']
    #allocation3 [shape = 's32[1]{0}', space=sflag, size = 0x4, scoped, tag = 'scoped memory for tpu_custom_call.1']
    #allocation4 [shape = 's32[1]{0}', space=sflag, size = 0x4, scoped, tag = 'scoped memory for tpu_custom_call.1']
    #allocation5 [shape = 'u8[2048]{0}', space=vmem, size = 0x800, scoped, tag = 'input window, operand 1, single buffered']
    #allocation6 [shape = 's32[1]{0}', space=sflag, size = 0x4, scoped, tag = 'scoped memory for tpu_custom_call.1']
    #allocation7 [shape = 'u8[8192]{0}', space=vmem, size = 0x2000, scoped, tag = 'output window, operand 0, single buffered']
    %10 = vsyncpa [#allocation3], 0
    %11 = vsyncpa [#allocation6], 0
    %12 = vsyncpa [#allocation4], 0
    // Predicated region
    $region2: #{tpu_custom_call.1} parent=1 // pred_check
      _
    $region3: #{tpu_custom_call.1} parent=1 // pred_check_branch
      %14 = sbr.rel (0) target = $region5
    $region4: #{tpu_custom_call.1} parent=1 // pred_region
      %s16 = ssub.s32 256, 256
      %17 = vsyncadd [#allocation3], %s16
      %s18 = sshll.u32 [#allocation2], 4
      %s19 = int_to_ptr.vmem [resolvable:$true] %s18
      %24 = dma.hbm_to_vmem [thread:$0]  %s0, 256, %s19, [#allocation3], 128, 128, 8
    $region5: #{tpu_custom_call.1} parent=1 // pred_fallthru
      _
    // Predicated region
    $region6: #{tpu_custom_call.1} parent=1 // pred_check
      _
    $region7: #{tpu_custom_call.1} parent=1 // pred_check_branch
      %26 = sbr.rel (0) target = $region9
    $region8: #{tpu_custom_call.1} parent=1 // pred_region
      %s28 = ssub.s32 64, 64
      %29 = vsyncadd [#allocation6], %s28
      %s31 = sshll.u32 [#allocation5], 4
      %s32 = int_to_ptr.vmem [resolvable:$true] %s31
      %34 = dma.hbm_to_vmem [thread:$0]  %s1, 64, %s32, [#allocation6]
    $region9: #{tpu_custom_call.1} parent=1 // pred_fallthru
      _
    // Predicated region
    $region10: #{tpu_custom_call.1} parent=1 // pred_check
      _
    $region11: #{tpu_custom_call.1} parent=1 // pred_check_branch
      %36 = sbr.rel (0) target = $region13
    $region12: #{tpu_custom_call.1} parent=1 // pred_region
      _
    $region13: #{tpu_custom_call.1} parent=1 // pred_fallthru
      _
    // Predicated region
    $region14: #{tpu_custom_call.1} parent=1 // pred_check
      _
    $region15: #{tpu_custom_call.1} parent=1 // pred_check_branch
      %38 = sbr.rel (0) target = $region17
    $region16: #{tpu_custom_call.1} parent=1 // pred_region
      _
    $region17: #{tpu_custom_call.1} parent=1 // pred_fallthru
      _
    // Predicated region
    $region18: #{tpu_custom_call.1} parent=1 // pred_check
      _
    $region19: #{tpu_custom_call.1} parent=1 // pred_check_branch
      %40 = sbr.rel (0) target = $region21
    $region20: #{tpu_custom_call.1} parent=1 // pred_region
      _
    $region21: #{tpu_custom_call.1} parent=1 // pred_fallthru
      _
    // Predicated region
    $region22: #{tpu_custom_call.1} parent=1 // pred_check
      _
    $region23: #{tpu_custom_call.1} parent=1 // pred_check_branch
      %42 = sbr.rel (0) target = $region25
    $region24: #{tpu_custom_call.1} parent=1 // pred_region
      %43 = dma.done [#allocation3], 256
    $region25: #{tpu_custom_call.1} parent=1 // pred_fallthru
      _
    // Predicated region
    $region26: #{tpu_custom_call.1} parent=1 // pred_check
      _
    $region27: #{tpu_custom_call.1} parent=1 // pred_check_branch
      %45 = sbr.rel (0) target = $region29
    $region28: #{tpu_custom_call.1} parent=1 // pred_region
      %46 = dma.done [#allocation6], 64
    $region29: #{tpu_custom_call.1} parent=1 // pred_fallthru
      _
    %v47 = vld [vmem:[#allocation2] sm:$0xff]
    %v48 = vld [vmem:[#allocation2 + $0x8] sm:$0xff]
    %v51 = vcombine.high %v47, %v47
    %v52 = vcombine.high %v48, %v48
    %vm55 = vcmask 1043456
    %v56 = vsel %vm55, %v47, 0.0
    %v57 = vsel %vm55, %v51, 0.0
    %v58 = vadd.f32 %v56, %v57
    %59 = vadd.xlane.f32.xlu0 %v58
    %v60 = vpop.xlane.xlu0 %59
    %v61 = vsel %vm55, %v48, 0.0
    %v62 = vsel %vm55, %v52, 0.0
    %v63 = vadd.f32 %v61, %v62
    %64 = vadd.xlane.f32.xlu0 %v63
    %v65 = vpop.xlane.xlu0 %64
    %v66 = vmul.f32 %v60, 0.00390625
    %v67 = vmul.f32 %v65, 0.00390625
    %v68 = vmul.f32 %v66, %v66
    %v69 = vmul.f32 %v67, %v67
    %v72 = vlaneseq
    %v73 = vand.u32 %v72, 127
    %v74 = vlaneseq
    %v75 = vshrl.u32 %v74, 7
    %v76 = vsub.s32 %v73, %v75
    %v77 = vrot.slane %v68, %v76
    %v78 = vlaneseq
    %v79 = vshrl.u32 %v78, 7
    %v80 = vsub.s32 %v73, %v79
    %v81 = vrot.slane %v69, %v80
    %vm82 = vcmask 1041409
    %v83 = vsel %vm82, %v81, %v77
    %vm85 = vcmask 25600
    %v86 = vsel %vm85, %v83, 0.0
    %87 = vadd.xlane.f32.xlu0 %v86
    %v88 = vpop.xlane.xlu0 %87
    %v89 = vld [vmem:[#allocation5] sm:$0xf]
    %v90 = vld [vmem:[%s2] sm:$0x1]
    %v92 = vlaneseq
    %v93 = vshrl.u32 %v92, 7
    %v94 = vsub.s32 0, %v93
    %v95 = vrot.slane %v90, %v94
    %v99 = vlaneseq
    %v100 = vshrl.u32 %v99, 7
    %v101 = vsub.s32 %v73, %v100
    %v102 = vrot.slane %v66, %v101
    %v103 = vlaneseq
    %v104 = vshrl.u32 %v103, 7
    %v105 = vsub.s32 %v73, %v104
    %v106 = vrot.slane %v67, %v105
    %v107 = vsel %vm82, %v106, %v102
    %vm108 = vcmask 31744
    %v109 = vsel %vm108, %v107, 0
    %v112 = vsel %vm55, %v89, 0
    %114 = vmatprep.subr.mxu0 0.0
    %115 = vmatpush1.msra.mxu0 %v112
    %116 = vmatprep.subr.mxu0 0.0
    %117 = vmatpush1.msra.mxu0 0.0
    %118 = vmatprep.subr.mxu0 0.0
    %119 = vmatpush1.msra.mxu0 0.0
    %120 = vmatprep.subr.mxu0 0.0
    %121 = vmatpush1.msra.mxu0 0.0
    %122 = vmatprep.subr.mxu0 0.0
    %123 = vmatpush1.msra.mxu0 0.0
    %124 = vmatprep.subr.mxu0 0.0
    %125 = vmatpush1.msra.mxu0 0.0
    %126 = vmatprep.subr.mxu0 0.0
    %127 = vmatpush1.msra.mxu0 0.0
    %128 = vmatprep.subr.mxu0 0.0
    %129 = vmatpush1.msra.mxu0 0.0
    %130 = vmatprep.subr.mxu0 0.0
    %131 = vmatpush1.msra.mxu0 0.0
    %132 = vmatprep.subr.mxu0 0.0
    %133 = vmatpush1.msra.mxu0 0.0
    %134 = vmatprep.subr.mxu0 0.0
    %135 = vmatpush1.msra.mxu0 0.0
    %136 = vmatprep.subr.mxu0 0.0
    %137 = vmatpush1.msra.mxu0 0.0
    %138 = vmatprep.subr.mxu0 0.0
    %139 = vmatpush1.msra.mxu0 0.0
    %140 = vmatprep.subr.mxu0 0.0
    %141 = vmatpush1.msra.mxu0 0.0
    %142 = vmatprep.subr.mxu0 0.0
    %143 = vmatpush1.msra.mxu0 0.0
    %144 = vmatprep.subr.mxu0 0.0
    %145 = vmatpush1.msra.mxu0 0.0
    %146 = vmatprep.subr.mxu0 0.0
    %147 = vmatpush1.msra.mxu0 0.0
    %148 = vmatprep.subr.mxu0 0.0
    %149 = vmatpush1.msra.mxu0 0.0
    %150 = vmatprep.subr.mxu0 0.0
    %151 = vmatpush1.msra.mxu0 0.0
    %152 = vmatprep.subr.mxu0 0.0
    %153 = vmatpush1.msra.mxu0 0.0
    %154 = vmatprep.subr.mxu0 0.0
    %155 = vmatpush1.msra.mxu0 0.0
    %156 = vmatprep.subr.mxu0 0.0
    %157 = vmatpush1.msra.mxu0 0.0
    %158 = vmatprep.subr.mxu0 0.0
    %159 = vmatpush1.msra.mxu0 0.0
    %160 = vmatprep.subr.mxu0 0.0
    %161 = vmatpush1.msra.mxu0 0.0
    %162 = vmatprep.subr.mxu0 0.0
    %163 = vmatpush1.msra.mxu0 0.0
    %164 = vmatprep.subr.mxu0 0.0
    %165 = vmatpush1.msra.mxu0 0.0
    %166 = vmatprep.subr.mxu0 0.0
    %167 = vmatpush1.msra.mxu0 0.0
    %168 = vmatprep.subr.mxu0 0.0
    %169 = vmatpush1.msra.mxu0 0.0
    %170 = vmatprep.subr.mxu0 0.0
    %171 = vmatpush1.msra.mxu0 0.0
    %172 = vmatprep.subr.mxu0 0.0
    %173 = vmatpush1.msra.mxu0 0.0
    %174 = vmatprep.subr.mxu0 0.0
    %175 = vmatpush1.msra.mxu0 0.0
    %176 = vmatprep.subr.mxu0 0.0
    %177 = vmatpush1.msra.mxu0 0.0
    %178 = vmatprep.mubr.f32.mxu0 0.0
    %179 = vmatmul.mubr.f32.gmra.mrb[0].mxu0 %v109
    %v180 = vpop.f32.mrb[0].mxu0
    %v181 = vadd.f32 %v95, %v180
    %v182 = vpop.f32.mrb[0].mxu0
    %183 = vdwg.mxu0
    %v184 = vadd.f32 %v181, %v88
    %v185 = vmax.f32 %v184, 0.0
    %v186 = vld [vmem:[%s3] sm:$0xf]
    %v187 = vld [vmem:[%s4] sm:$0x1]
    %v189 = vlaneseq
    %v190 = vshrl.u32 %v189, 7
    %v191 = vsub.s32 0, %v190
    %v192 = vrot.slane %v187, %v191
    %v195 = vsel %vm108, %v185, 0
    %v198 = vsel %vm55, %v186, 0
    %200 = vmatprep.subr.mxu0 0.0
    %201 = vmatpush1.msra.mxu0 %v198
    %202 = vmatprep.subr.mxu0 0.0
    %203 = vmatpush1.msra.mxu0 0.0
    %204 = vmatprep.subr.mxu0 0.0
    %205 = vmatpush1.msra.mxu0 0.0
    %206 = vmatprep.subr.mxu0 0.0
    %207 = vmatpush1.msra.mxu0 0.0
    %208 = vmatprep.subr.mxu0 0.0
    %209 = vmatpush1.msra.mxu0 0.0
    %210 = vmatprep.subr.mxu0 0.0
    %211 = vmatpush1.msra.mxu0 0.0
    %212 = vmatprep.subr.mxu0 0.0
    %213 = vmatpush1.msra.mxu0 0.0
    %214 = vmatprep.subr.mxu0 0.0
    %215 = vmatpush1.msra.mxu0 0.0
    %216 = vmatprep.subr.mxu0 0.0
    %217 = vmatpush1.msra.mxu0 0.0
    %218 = vmatprep.subr.mxu0 0.0
    %219 = vmatpush1.msra.mxu0 0.0
    %220 = vmatprep.subr.mxu0 0.0
    %221 = vmatpush1.msra.mxu0 0.0
    %222 = vmatprep.subr.mxu0 0.0
    %223 = vmatpush1.msra.mxu0 0.0
    %224 = vmatprep.subr.mxu0 0.0
    %225 = vmatpush1.msra.mxu0 0.0
    %226 = vmatprep.subr.mxu0 0.0
    %227 = vmatpush1.msra.mxu0 0.0
    %228 = vmatprep.subr.mxu0 0.0
    %229 = vmatpush1.msra.mxu0 0.0
    %230 = vmatprep.subr.mxu0 0.0
    %231 = vmatpush1.msra.mxu0 0.0
    %232 = vmatprep.subr.mxu0 0.0
    %233 = vmatpush1.msra.mxu0 0.0
    %234 = vmatprep.subr.mxu0 0.0
    %235 = vmatpush1.msra.mxu0 0.0
    %236 = vmatprep.subr.mxu0 0.0
    %237 = vmatpush1.msra.mxu0 0.0
    %238 = vmatprep.subr.mxu0 0.0
    %239 = vmatpush1.msra.mxu0 0.0
    %240 = vmatprep.subr.mxu0 0.0
    %241 = vmatpush1.msra.mxu0 0.0
    %242 = vmatprep.subr.mxu0 0.0
    %243 = vmatpush1.msra.mxu0 0.0
    %244 = vmatprep.subr.mxu0 0.0
    %245 = vmatpush1.msra.mxu0 0.0
    %246 = vmatprep.subr.mxu0 0.0
    %247 = vmatpush1.msra.mxu0 0.0
    %248 = vmatprep.subr.mxu0 0.0
    %249 = vmatpush1.msra.mxu0 0.0
    %250 = vmatprep.subr.mxu0 0.0
    %251 = vmatpush1.msra.mxu0 0.0
    %252 = vmatprep.subr.mxu0 0.0
    %253 = vmatpush1.msra.mxu0 0.0
    %254 = vmatprep.subr.mxu0 0.0
    %255 = vmatpush1.msra.mxu0 0.0
    %256 = vmatprep.subr.mxu0 0.0
    %257 = vmatpush1.msra.mxu0 0.0
    %258 = vmatprep.subr.mxu0 0.0
    %259 = vmatpush1.msra.mxu0 0.0
    %260 = vmatprep.subr.mxu0 0.0
    %261 = vmatpush1.msra.mxu0 0.0
    %262 = vmatprep.subr.mxu0 0.0
    %263 = vmatpush1.msra.mxu0 0.0
    %264 = vmatprep.mubr.f32.mxu0 0.0
    %265 = vmatmul.mubr.f32.gmra.mrb[0].mxu0 %v195
    %v266 = vpop.f32.mrb[0].mxu0
    %v267 = vadd.f32 %v192, %v266
    %v268 = vpop.f32.mrb[0].mxu0
    %269 = vdwg.mxu0
    %v270 = vxor.u32 %v267, 2147483648
    %v271 = vmul.f32 %v270, 1.442695
    %v272 = vpow.pop %v271
    %v273 = vadd.f32 %v272, 1.0
    %v274 = vrcp.pop %v273
    %v275 = vmul.f32 1.0, %v274
    %v276 = vlaneseq
    %v277 = vshrl.u32 %v276, 7
    %v278 = vsub.s32 0, %v277
    %v279 = vrot.slane %v275, %v278
    %281 = vbcast.lane.b32.xlu0 %v279, 256
    %v282 = vpop.permute.xlu0 %281
    %v283 = vlaneseq
    %v284 = vshrl.u32 %v283, 7
    %v285 = vsub.s32 1, %v284
    %v286 = vrot.slane %v275, %v285
    %288 = vbcast.lane.b32.xlu0 %v286, 256
    %v289 = vpop.permute.xlu0 %288
    %v293 = vunpack.c.l.s4 839922192
    %v294 = vunpack.c.0.s8 %v293
    %v295 = vlaneseq
    %v296 = vshrl.u32 %v295, 7
    %v297 = vsub.s32 %v294, %v296
    %v298 = vrot.slane %v282, %v297
    %v300 = vunpack.c.l.s4 839922192
    %v301 = vunpack.c.0.s8 %v300
    %v302 = vlaneseq
    %v303 = vshrl.u32 %v302, 7
    %v304 = vsub.s32 %v301, %v303
    %v305 = vrot.slane %v289, %v304
    %v308 = vmul.f32 %v47, %v298
    %v309 = vmul.f32 %v48, %v305
    %310 = vst [vmem:[#allocation7] sm:$0xff] %v308
    %311 = vst [vmem:[#allocation7 + $0x8] sm:$0xff] %v309
    // Predicated region
    $region30: #{tpu_custom_call.1} parent=1 // pred_check
      _
    $region31: #{tpu_custom_call.1} parent=1 // pred_check_branch
      %313 = sbr.rel (0) target = $region33
    $region32: #{tpu_custom_call.1} parent=1 // pred_region
      %s315 = ssub.s32 256, 256
      %316 = vsyncadd [#allocation4], %s315
      %s317 = sshll.u32 [#allocation7], 4
      %s318 = int_to_ptr.vmem [resolvable:$true] %s317
      %323 = dma.vmem_to_hbm [thread:$0]  %s318, 256, %s5, [#allocation4], 128, 128, 8
    $region33: #{tpu_custom_call.1} parent=1 // pred_fallthru
      _
    // Predicated region
    $region34: #{tpu_custom_call.1} parent=1 // pred_check
      _
    $region35: #{tpu_custom_call.1} parent=1 // pred_check_branch
      %325 = sbr.rel (0) target = $region37
    $region36: #{tpu_custom_call.1} parent=1 // pred_region
      %326 = dma.done [#allocation4], 256
    $region37: #{tpu_custom_call.1} parent=1 // pred_fallthru
      _
    %327 = vsyncpa [#allocation3], 1
    %328 = vsyncpa [#allocation6], 1
    %329 = vsyncpa [#allocation4], 1

</llo_original>
